<compile_context>
chip_gen: v7x
topology: tpu7x:2x2x1
jax: 0.10.0
libtpu: 0.0.40
codegen_flags: <defaults>
</compile_context>

<pallas_src>
import functools
import math

import numpy as np
import jax
import jax.numpy as jnp
from jax import random
from jax.experimental import pallas as pl
from jax.experimental.pallas import tpu as pltpu

F32 = jnp.float32
_VMEM_LIMIT = 32 * 1024 * 1024   # explicit scoped-VMEM budget (v5e default is 16 MiB)


def round_up(x, m):
    return (x + m - 1) // m * m


def pick_tile(dim, cap):
    """Largest multiple of 128 <= cap that divides `dim` (dim is a multiple of 128)."""
    t = min(dim, cap)
    t -= t % 128
    while t >= 128:
        if dim % t == 0:
            return t
        t -= 128
    return 128


def conv_out_size(h, k, s, d, p):
    return (h + 2 * p - d * (k - 1) - 1) // s + 1


# --------------------------------------------------------------------------
# Fused matmul kernel:  out = act((A @ B) * scale + bias [+ residual])
# --------------------------------------------------------------------------
def _make_mm_kernel(relu, has_res):
    def kernel(*refs):
        if has_res:
            a_ref, b_ref, s_ref, c_ref, r_ref, o_ref, acc_ref = refs
        else:
            a_ref, b_ref, s_ref, c_ref, o_ref, acc_ref = refs
        k = pl.program_id(2)

        @pl.when(k == 0)
        def _():
            acc_ref[...] = jnp.zeros_like(acc_ref)

        acc_ref[...] += jnp.dot(a_ref[...], b_ref[...],
                                preferred_element_type=jnp.float32)

        @pl.when(k == pl.num_programs(2) - 1)
        def _():
            y = acc_ref[...] * s_ref[...] + c_ref[...]
            if has_res:
                y = y + r_ref[...]
            if relu:
                y = jnp.maximum(y, 0.0)
            o_ref[...] = y.astype(o_ref.dtype)

    return kernel


_MM_KERNELS = {(r, h): _make_mm_kernel(r, h)
               for r in (False, True) for h in (False, True)}


def _mm(a, b, scale, bias, residual, relu):
    """act((A @ B) * scale + bias [+ residual]); returns (M, Np) with padded cols."""
    m, k = a.shape
    kp, np_ = b.shape

    TM = 256 if (m % 256 == 0 and m >= 512) else 128
    TN = 256 if (np_ % 256 == 0 and np_ >= 512) else 128   # grid_j >= 2 whenever np_ >= 256
    TK = pick_tile(kp, 1024)
    mp = round_up(m, TM)

    if (mp, kp) != (m, k):
        a = jnp.pad(a, ((0, mp - m), (0, kp - k)))

    has_res = residual is not None
    inputs = [a, b, scale, bias]
    in_specs = [
        pl.BlockSpec((TM, TK), lambda i, j, kk: (i, kk)),
        pl.BlockSpec((TK, TN), lambda i, j, kk: (kk, j)),
        pl.BlockSpec((1, TN), lambda i, j, kk: (0, j)),
        pl.BlockSpec((1, TN), lambda i, j, kk: (0, j)),
    ]
    if has_res:
        if residual.shape != (mp, np_):
            residual = jnp.pad(residual, ((0, mp - residual.shape[0]), (0, 0)))
        inputs.append(residual)
        in_specs.append(pl.BlockSpec((TM, TN), lambda i, j, kk: (i, j)))

    out = pl.pallas_call(
        _MM_KERNELS[(relu, has_res)],
        out_shape=jax.ShapeDtypeStruct((mp, np_), F32),
        grid_spec=pltpu.PrefetchScalarGridSpec(
            num_scalar_prefetch=0,
            grid=(mp // TM, np_ // TN, kp // TK),
            in_specs=in_specs,
            out_specs=pl.BlockSpec((TM, TN), lambda i, j, kk: (i, j)),
            scratch_shapes=[pltpu.VMEM((TM, TN), jnp.float32)],
        ),
        compiler_params=pltpu.CompilerParams(
            dimension_semantics=("parallel", "parallel", "arbitrary"),
            vmem_limit_bytes=_VMEM_LIMIT),
    )(*inputs)
    return out[:m] if mp != m else out


# --------------------------------------------------------------------------
# Direct (no-im2col) stride-1/dilation-1 conv: manual DMA of tap-shifted row
# blocks from the (guard-padded, flattened) feature map; VMEM-resident weights.
# --------------------------------------------------------------------------
def _make_direct_kernel(tap_offsets, relu, tm, local_acc):
    ntaps = len(tap_offsets)

    def kernel(x_hbm, w_ref, s_ref, c_ref, o_ref, a_buf, *rest):
        if local_acc:
            (sems,) = rest
            acc_ref = None
        else:
            acc_ref, sems = rest

        m0 = pl.program_id(0) * tm

        # Issue all tap DMAs up front (they overlap each other and the MXU work
        # below); each tap is waited on only right before its matmul.
        copies = []
        for t in range(ntaps):
            cp = pltpu.make_async_copy(
                x_hbm.at[pl.ds(m0 + tap_offsets[t], tm)],
                a_buf.at[t],
                sems.at[t])
            cp.start()
            copies.append(cp)

        if local_acc:
            acc = None
            for t in range(ntaps):
                copies[t].wait()
                d = jnp.dot(a_buf[t], w_ref[t], preferred_element_type=jnp.float32)
                acc = d if acc is None else acc + d
        else:
            for t in range(ntaps):
                copies[t].wait()
                d = jnp.dot(a_buf[t], w_ref[t], preferred_element_type=jnp.float32)
                if t == 0:
                    acc_ref[...] = d
                else:
                    acc_ref[...] += d
            acc = acc_ref[...]

        y = acc * s_ref[...] + c_ref[...]
        if relu:
            y = jnp.maximum(y, 0.0)
        o_ref[...] = y.astype(o_ref.dtype)

    return kernel


@functools.partial(jax.jit, static_argnames=("taps", "kh", "kw", "dilation",
                                              "padding", "relu"))
def _direct_conv(x, w, scale, bias, *, taps, kh, kw, dilation, padding, relu):
    n, h, wd, cin_p = x.shape
    ntaps, wcin, np_ = w.shape
    assert ntaps == len(taps) and wcin == cin_p

    hp, wdp = h + 2 * padding, wd + 2 * padding
    oh = hp - dilation * (kh - 1)
    ow = wdp - dilation * (kw - 1)

    TM = 128
    m_flat = n * hp * wdp
    mp = round_up(m_flat, TM)

    # Flat row offset of each tap relative to the padded-coordinate "center".
    offs = [(ti * dilation - padding) * wdp + (tj * dilation - padding)
            for (ti, tj) in taps]
    guard_lo = max(-min(offs), 0)
    guard_hi = (mp - m_flat) + max(max(offs), 0)
    tap_offsets = tuple(int(guard_lo + o) for o in offs)

    # Pad spatially once, flatten, add zero guard rows (channels already padded).
    xg = jnp.pad(x, ((0, 0), (padding, padding), (padding, padding), (0, 0)))
    xg = xg.reshape(m_flat, cin_p)
    xg = jnp.pad(xg, ((guard_lo, guard_hi), (0, 0)))

    local_acc = np_ <= 128
    scratch = [pltpu.VMEM((ntaps, TM, cin_p), jnp.float32)]
    if not local_acc:
        scratch.append(pltpu.VMEM((TM, np_), jnp.float32))
    scratch.append(pltpu.SemaphoreType.DMA((ntaps,)))

    out = pl.pallas_call(
        _make_direct_kernel(tap_offsets, relu, TM, local_acc),
        out_shape=jax.ShapeDtypeStruct((mp, np_), F32),
        grid_spec=pltpu.PrefetchScalarGridSpec(
            num_scalar_prefetch=0,
            grid=(mp // TM,),
            in_specs=[
                pl.BlockSpec(memory_space=pl.ANY),                       # flat input (HBM)
                pl.BlockSpec((ntaps, cin_p, np_), lambda i: (0, 0, 0)),  # resident weights
                pl.BlockSpec((1, np_), lambda i: (0, 0)),                # BN scale
                pl.BlockSpec((1, np_), lambda i: (0, 0)),                # BN bias
            ],
            out_specs=pl.BlockSpec((TM, np_), lambda i: (i, 0)),
            scratch_shapes=scratch,
        ),
        compiler_params=pltpu.CompilerParams(
            dimension_semantics=("parallel",),
            vmem_limit_bytes=_VMEM_LIMIT),
    )(xg, w, scale, bias)

    out = out[:m_flat].reshape(n, hp, wdp, np_)
    return out[:, padding:padding + oh, padding:padding + ow, :]


# --------------------------------------------------------------------------
# im2col path (strided convs, dilated convs, 1x1s), glue fused under jit
# --------------------------------------------------------------------------
def _extract_patches(x, taps, kh, kw, stride, dilation, padding):
    n, h, wd, c = x.shape
    if padding > 0:
        x = jnp.pad(x, ((0, 0), (padding, padding), (padding, padding), (0, 0)))
    hp, wdp = h + 2 * padding, wd + 2 * padding
    oh = (hp - dilation * (kh - 1) - 1) // stride + 1
    ow = (wdp - dilation * (kw - 1) - 1) // stride + 1
    cols = []
    for (i, j) in taps:
        sl = x[:, i * dilation:i * dilation + stride * (oh - 1) + 1:stride,
                  j * dilation:j * dilation + stride * (ow - 1) + 1:stride, :]
        cols.append(sl)
    patches = cols[0] if len(cols) == 1 else jnp.concatenate(cols, axis=-1)
    return patches.reshape(n * oh * ow, len(taps) * c), (n, oh, ow)


def _im2col_conv_impl(x, w, scale, bias, residual, *, taps, kh, kw, stride,
                      dilation, padding, relu):
    patches, (n, oh, ow) = _extract_patches(x, taps, kh, kw, stride, dilation, padding)
    np_ = w.shape[-1]
    res = residual.reshape(n * oh * ow, np_) if residual is not None else None
    y = _mm(patches, w, scale, bias, res, relu)
    return y.reshape(n, oh, ow, np_)


_CONV_STATICS = ("taps", "kh", "kw", "stride", "dilation", "padding", "relu")


@functools.partial(jax.jit, static_argnames=_CONV_STATICS)
def _im2col_conv(x, w, scale, bias, *, taps, kh, kw, stride, dilation, padding, relu):
    return _im2col_conv_impl(x, w, scale, bias, None, taps=taps, kh=kh, kw=kw,
                             stride=stride, dilation=dilation, padding=padding,
                             relu=relu)


@functools.partial(jax.jit, static_argnames=_CONV_STATICS)
def _im2col_conv_res(x, w, scale, bias, residual, *, taps, kh, kw, stride,
                     dilation, padding, relu):
    return _im2col_conv_impl(x, w, scale, bias, residual, taps=taps, kh=kh, kw=kw,
                             stride=stride, dilation=dilation, padding=padding,
                             relu=relu)


def conv_forward(x, p, relu=True, residual=None):
    if p["path"] == "direct":
        assert residual is None
        return _direct_conv(x, p["w"], p["scale"], p["bias"],
                            taps=p["taps"], kh=p["kh"], kw=p["kw"],
                            dilation=p["dilation"], padding=p["padding"], relu=relu)
    args = dict(taps=p["taps"], kh=p["kh"], kw=p["kw"], stride=p["stride"],
                dilation=p["dilation"], padding=p["padding"], relu=relu)
    if residual is not None:
        return _im2col_conv_res(x, p["w"], p["scale"], p["bias"], residual, **args)
    return _im2col_conv(x, p["w"], p["scale"], p["bias"], **args)


# --------------------------------------------------------------------------
# Pooling kernels
# --------------------------------------------------------------------------
def _make_max_kernel(ntaps):
    def kernel(*refs):
        o_ref = refs[ntaps]
        acc = refs[0][...]
        for t in range(1, ntaps):
            acc = jnp.maximum(acc, refs[t][...])
        o_ref[...] = acc
    return kernel


@jax.jit
def maxpool_3x3_s2(x):
    n, h, wd, c = x.shape
    xp = jnp.pad(x, ((0, 0), (1, 1), (1, 1), (0, 0)), constant_values=-jnp.inf)
    hp, wdp = h + 2, wd + 2
    oh = (hp - 3) // 2 + 1
    ow = (wdp - 3) // 2 + 1
    taps = []
    for i in range(3):
        for j in range(3):
            sl = xp[:, i:i + 2 * (oh - 1) + 1:2, j:j + 2 * (ow - 1) + 1:2, :]
            taps.append(sl.reshape(n * oh * ow, c))
    m = n * oh * ow
    bm = 512 if m % 512 == 0 else (256 if m % 256 == 0 else 128)
    mp = round_up(m, bm)
    if mp != m:
        taps = [jnp.pad(t, ((0, mp - m), (0, 0))) for t in taps]
    out = pl.pallas_call(
        _make_max_kernel(9),
        out_shape=jax.ShapeDtypeStruct((mp, c), F32),
        grid_spec=pltpu.PrefetchScalarGridSpec(
            num_scalar_prefetch=0,
            grid=(mp // bm,),
            in_specs=[pl.BlockSpec((bm, c), lambda i: (i, 0))] * 9,
            out_specs=pl.BlockSpec((bm, c), lambda i: (i, 0)),
        ),
        compiler_params=pltpu.CompilerParams(
            dimension_semantics=("parallel",),
            vmem_limit_bytes=_VMEM_LIMIT),
    )(*taps)
    return out[:m].reshape(n, oh, ow, c)


def _avgpool_kernel(x_ref, o_ref):
    o_ref[...] = jnp.mean(x_ref[...], axis=1)


@jax.jit
def global_avg_pool(x):
    n, h, wd, c = x.shape
    xf = x.reshape(n, h * wd, c)
    cb = 256 if c % 256 == 0 else 128
    out = pl.pallas_call(
        _avgpool_kernel,
        out_shape=jax.ShapeDtypeStruct((n, c), F32),
        grid_spec=pltpu.PrefetchScalarGridSpec(
            num_scalar_prefetch=0,
            grid=(c // cb,),
            in_specs=[pl.BlockSpec((n, h * wd, cb), lambda j: (0, 0, j))],
            out_specs=pl.BlockSpec((n, cb), lambda j: (0, j)),
        ),
        compiler_params=pltpu.CompilerParams(
            dimension_semantics=("parallel",),
            vmem_limit_bytes=_VMEM_LIMIT),
    )(xf)
    return out.reshape(n, 1, 1, c)


# --------------------------------------------------------------------------
# Bilinear resize (PyTorch align_corners=False): static gathers + Pallas lerp.
# --------------------------------------------------------------------------
def _lerp_kernel(a_ref, b_ref, w_ref, o_ref):
    wv = w_ref[...]
    o_ref[...] = a_ref[...] + wv * (b_ref[...] - a_ref[...])


def _lerp(a, b, w):
    m, c = a.shape
    mp = round_up(m, 128)
    if mp != m:
        a = jnp.pad(a, ((0, mp - m), (0, 0)))
        b = jnp.pad(b, ((0, mp - m), (0, 0)))
        w = jnp.pad(w, ((0, mp - m), (0, 0)))
    bm = pick_tile(mp, 1024)
    out = pl.pallas_call(
        _lerp_kernel,
        out_shape=jax.ShapeDtypeStruct((mp, c), F32),
        grid_spec=pltpu.PrefetchScalarGridSpec(
            num_scalar_prefetch=0,
            grid=(mp // bm,),
            in_specs=[pl.BlockSpec((bm, c), lambda i: (i, 0)),
                      pl.BlockSpec((bm, c), lambda i: (i, 0)),
                      pl.BlockSpec((bm, 1), lambda i: (i, 0))],
            out_specs=pl.BlockSpec((bm, c), lambda i: (i, 0)),
        ),
        compiler_params=pltpu.CompilerParams(
            dimension_semantics=("parallel",),
            vmem_limit_bytes=_VMEM_LIMIT),
    )(a, b, w)
    return out[:m] if mp != m else out


def _interp_coeffs(out_size, in_size):
    if in_size == 1:
        z = np.zeros(out_size, np.int32)
        return z, z, np.zeros(out_size, np.float32)
    scale = in_size / out_size
    dst = np.arange(out_size)
    src = np.maximum((dst + 0.5) * scale - 0.5, 0.0)
    lo = np.floor(src).astype(np.int32)
    hi = np.minimum(lo + 1, in_size - 1)
    wt = (src - lo).astype(np.float32)
    return lo, hi, wt


@functools.partial(jax.jit, static_argnames=("out_h", "out_w"))
def bilinear_resize(x, *, out_h, out_w):
    n, h, wd, c = x.shape
    lo_h, hi_h, wt_h = _interp_coeffs(out_h, h)
    lo_w, hi_w, wt_w = _interp_coeffs(out_w, wd)

    # H axis (channels stay last / lane-dense, no HBM transposes)
    y = _lerp(x[:, lo_h].reshape(n * out_h, wd * c),
              x[:, hi_h].reshape(n * out_h, wd * c),
              jnp.asarray(np.tile(wt_h, n).reshape(n * out_h, 1)))
    y = y.reshape(n, out_h, wd, c)

    # W axis (c is 128-padded -> lane-dense stores)
    z = _lerp(y[:, :, lo_w].reshape(n * out_h * out_w, c),
              y[:, :, hi_w].reshape(n * out_h * out_w, c),
              jnp.asarray(np.tile(wt_w, n * out_h).reshape(n * out_h * out_w, 1)))
    return z.reshape(n, out_h, out_w, c)


# --------------------------------------------------------------------------
# Deterministic synthetic parameters (eval-mode BN folded into scale/bias).
# --------------------------------------------------------------------------
class KeyGen:
    def __init__(self, seed):
        self.key = random.PRNGKey(seed)

    def __call__(self):
        self.key, sub = random.split(self.key)
        return sub


def kept_taps(kh, kw, stride, dilation, padding, in_hw):
    if in_hw is None:
        return tuple((i, j) for i in range(kh) for j in range(kw))
    h, wd = in_hw
    oh = conv_out_size(h, kh, stride, dilation, padding)
    ow = conv_out_size(wd, kw, stride, dilation, padding)
    keep = []
    for i in range(kh):
        for j in range(kw):
            r_lo, r_hi = i * dilation, (oh - 1) * stride + i * dilation
            c_lo, c_hi = j * dilation, (ow - 1) * stride + j * dilation
            if (r_hi >= padding and r_lo < padding + h and
                    c_hi >= padding and c_lo < padding + wd):
                keep.append((i, j))
    return tuple(keep)


def init_conv(kg, kh, kw, cin, cout, *, stride=1, dilation=1, padding=0,
              in_hw=None, conv_bias=False, cin_data=None):
    if cin_data is None:
        cin_data = round_up(cin, 128)   # incoming activations carry 128-padded channels
    fan_in = kh * kw * cin
    w_full = random.normal(kg(), (kh, kw, cin, cout), F32) * math.sqrt(2.0 / fan_in)
    if conv_bias:
        scale = jnp.ones((cout,), F32)
        bias = 0.01 * random.normal(kg(), (cout,), F32)
    else:
        gamma = 1.0 + 0.1 * random.normal(kg(), (cout,), F32)
        beta = 0.1 * random.normal(kg(), (cout,), F32)
        rmean = 0.1 * random.normal(kg(), (cout,), F32)
        rvar = 1.0 + 0.1 * jnp.abs(random.normal(kg(), (cout,), F32))
        scale = gamma / jnp.sqrt(rvar + 1e-5)
        bias = beta - rmean * scale

    taps = kept_taps(kh, kw, stride, dilation, padding, in_hw)

    # ASPP atrous branches at small feature maps: if only the centre tap reads real
    # data (rates 12/24/36 on 8x8), the branch is exactly a 1x1 conv (K 18432->2048).
    if len(taps) == 1 and stride == 1:
        ti, tj = taps[0]
        if ti * dilation == padding and tj * dilation == padding:
            w_full = w_full[ti:ti + 1, tj:tj + 1]
            kh = kw = 1
            dilation, padding = 1, 0
            taps = ((0, 0),)

    np_ = round_up(cout, 128)
    scale_p = jnp.pad(scale, (0, np_ - cout)).reshape(1, np_)
    bias_p = jnp.pad(bias, (0, np_ - cout)).reshape(1, np_)
    w_taps = jnp.stack([w_full[i, j] for (i, j) in taps], axis=0)       # (T, cin, cout)
    w_taps = jnp.pad(w_taps, ((0, 0), (0, cin_data - cin), (0, np_ - cout)))

    # Direct path only for stride-1 / dilation-1 multi-tap convs; dilated 3x3s
    # (layer3/layer4) go through im2col so no MXU work is spent on inflated grids.
    use_direct = (stride == 1 and dilation == 1 and len(taps) > 1
                  and cin_data <= 512 and np_ <= 512)

    p = dict(kh=kh, kw=kw, stride=stride, dilation=dilation, padding=padding,
             taps=taps, cin=cin, cout=cout, scale=scale_p, bias=bias_p)
    if use_direct:
        p["path"] = "direct"
        p["w"] = w_taps                                                  # (T, cin_data, np_)
    else:
        kdim = len(taps) * cin_data
        kp = round_up(kdim, 128)
        p["path"] = "matmul"
        p["w"] = jnp.pad(w_taps.reshape(kdim, np_), ((0, kp - kdim), (0, 0)))
    return p


def init_resnet50_backbone(kg, in_hw):
    # ResNet-50, output stride 8: replace_stride_with_dilation=[False, True, True]
    h, wd = in_hw
    params = dict(conv1=init_conv(kg, 7, 7, 3, 64, stride=2, padding=3,
                                  in_hw=(h, wd), cin_data=3))
    h, wd = conv_out_size(h, 7, 2, 1, 3), conv_out_size(wd, 7, 2, 1, 3)
    h, wd = conv_out_size(h, 3, 2, 1, 1), conv_out_size(wd, 3, 2, 1, 1)   # maxpool

    layers = []
    inplanes, dilation = 64, 1
    layer_cfg = [(64, 3, 1, False), (128, 4, 2, False),
                 (256, 6, 2, True), (512, 3, 2, True)]
    for planes, nblocks, stride, dilate in layer_cfg:
        prev_dilation = dilation
        if dilate:
            dilation *= stride
            stride = 1
        has_ds = (stride != 1) or (inplanes != planes * 4)
        blocks = []

        blk = dict(conv1=init_conv(kg, 1, 1, inplanes, planes, in_hw=(h, wd)),
                   conv2=init_conv(kg, 3, 3, planes, planes, stride=stride,
                                   dilation=prev_dilation, padding=prev_dilation,
                                   in_hw=(h, wd)))
        h2 = conv_out_size(h, 3, stride, prev_dilation, prev_dilation)
        wd2 = conv_out_size(wd, 3, stride, prev_dilation, prev_dilation)
        blk["conv3"] = init_conv(kg, 1, 1, planes, planes * 4, in_hw=(h2, wd2))
        blk["downsample"] = (init_conv(kg, 1, 1, inplanes, planes * 4,
                                       stride=stride, in_hw=(h, wd))
                             if has_ds else None)
        blocks.append(blk)
        inplanes = planes * 4
        h, wd = h2, wd2

        for _ in range(1, nblocks):
            blocks.append(dict(
                conv1=init_conv(kg, 1, 1, inplanes, planes, in_hw=(h, wd)),
                conv2=init_conv(kg, 3, 3, planes, planes, stride=1,
                                dilation=dilation, padding=dilation, in_hw=(h, wd)),
                conv3=init_conv(kg, 1, 1, planes, planes * 4, in_hw=(h, wd)),
                downsample=None))
        layers.append(blocks)
    params["layers"] = layers
    return params, (h, wd)


def init_deeplab_head(kg, in_ch, num_classes, in_hw):
    branches = [init_conv(kg, 1, 1, in_ch, 256, in_hw=in_hw)]
    for rate in (12, 24, 36):
        branches.append(init_conv(kg, 3, 3, in_ch, 256,
                                  dilation=rate, padding=rate, in_hw=in_hw))
    return dict(
        branches=branches,
        pool=init_conv(kg, 1, 1, in_ch, 256, in_hw=(1, 1)),
        project=init_conv(kg, 1, 1, 5 * 256, 256, in_hw=in_hw),
        head=init_conv(kg, 3, 3, 256, 256, padding=1, in_hw=in_hw),
        cls=init_conv(kg, 1, 1, 256, num_classes, in_hw=in_hw, conv_bias=True),
    )


# --------------------------------------------------------------------------
# Forward pass
# --------------------------------------------------------------------------
def resnet_backbone_forward(x, params):
    x = conv_forward(x, params["conv1"], relu=True)
    x = maxpool_3x3_s2(x)
    for layer in params["layers"]:
        for blk in layer:
            identity = x
            out = conv_forward(x, blk["conv1"], relu=True)
            out = conv_forward(out, blk["conv2"], relu=True)
            if blk["downsample"] is not None:
                identity = conv_forward(x, blk["downsample"], relu=False)
            # conv3 -> bn3 -> (+identity) -> relu fused in the matmul epilogue
            x = conv_forward(out, blk["conv3"], relu=True, residual=identity)
    return x


def deeplab_head_forward(x, hp):
    n, h, wd, _ = x.shape
    feats = [conv_forward(x, p, relu=True) for p in hp["branches"]]   # ASPP 1x1 + pruned atrous
    pooled = global_avg_pool(x)                                       # ASPP pooling branch
    pooled = conv_forward(pooled, hp["pool"], relu=True)
    feats.append(jnp.broadcast_to(pooled, (n, h, wd, pooled.shape[-1])))
    cat = jnp.concatenate(feats, axis=-1)                             # (n, h, w, 1280)
    y = conv_forward(cat, hp["project"], relu=True)
    # TODO(synk): Dropout(0.5) after the ASPP projection is identity in eval mode.
    y = conv_forward(y, hp["head"], relu=True)
    y = conv_forward(y, hp["cls"], relu=False)                        # final 1x1, bias, no BN
    return y


def deeplab_forward(x_nchw, params):
    x = jnp.transpose(x_nchw, (0, 2, 3, 1)).astype(F32)               # NCHW -> NHWC
    _, h_in, w_in, _ = x.shape
    feat = resnet_backbone_forward(x, params["backbone"])
    out = deeplab_head_forward(feat, params["head"])                  # channels padded to 128
    out = bilinear_resize(out, out_h=h_in, out_w=w_in)                # (n, H, W, 128)
    out = out[..., :params["head"]["cls"]["cout"]]                    # slice to 7 classes last
    return jnp.transpose(out, (0, 3, 1, 2))                           # (n, 7, H, W)


# --------------------------------------------------------------------------
if __name__ == "__main__":
    kg = KeyGen(0)
    backbone, feat_hw = init_resnet50_backbone(kg, (64, 64))
    head = init_deeplab_head(kg, 2048, 7, feat_hw)
    params = dict(backbone=backbone, head=head)

    x = random.normal(random.PRNGKey(0), (2, 3, 64, 64), F32)         # NCHW input
    out = deeplab_forward(x, params)
    out = jax.block_until_ready(out)

    assert out.shape == (2, 7, 64, 64), out.shape
    assert out.dtype == jnp.float32
    print("KERNEL_OK")
</pallas_src>

<mosaic_0001>
module attributes {stable_mosaic.version = 11 : i64} {
  func.func @kernel(%arg0: i32, %arg1: i32, %arg2: i32, %arg3: memref<256x256xf32, #tpu.memory_space<vmem>>, %arg4: memref<256x128xf32, #tpu.memory_space<vmem>>, %arg5: memref<1x128xf32, #tpu.memory_space<vmem>>, %arg6: memref<1x128xf32, #tpu.memory_space<vmem>>, %arg7: memref<256x128xf32, #tpu.memory_space<vmem>>, %arg8: memref<256x128xf32, #tpu.memory_space<vmem>>) attributes {dimension_semantics = [#tpu.dimension_semantics<parallel>, #tpu.dimension_semantics<parallel>, #tpu.dimension_semantics<arbitrary>], iteration_bounds = array<i64: 8, 1, 1>, scalar_prefetch = 0 : i64, scratch_operands = 1 : i64, tpu.core_type = #tpu.core_type<tc>, window_params = [{transform_indices = @transform_0, window_bounds = array<i64: 256, 256>}, {transform_indices = @transform_1, window_bounds = array<i64: 256, 128>}, {transform_indices = @transform_2, window_bounds = array<i64: 1, 128>}, {transform_indices = @transform_3, window_bounds = array<i64: 1, 128>}, {transform_indices = @transform_4, window_bounds = array<i64: 256, 128>}]} {
    %c0_i32 = arith.constant 0 : i32
    %0 = arith.cmpi eq, %arg2, %c0_i32 : i32
    %1 = arith.extui %0 : i1 to i32
    %c0_i32_0 = arith.constant 0 : i32
    %2 = arith.cmpi ne, %1, %c0_i32_0 : i32
    scf.if %2 {
      %cst_10 = arith.constant 0.000000e+00 : f32
      %12 = vector.broadcast %cst_10 : f32 to vector<256x128xf32>
      %c0_11 = arith.constant 0 : index
      %c0_12 = arith.constant 0 : index
      %13 = vector.load %arg8[%c0_11, %c0_12] : memref<256x128xf32, #tpu.memory_space<vmem>>, vector<256x128xf32>
      tpu.vector_store %arg8[%c0_11, %c0_12], %12 {strides = array<i32>} : memref<256x128xf32, #tpu.memory_space<vmem>>, vector<256x128xf32>,
    } else {
    }
    %c0 = arith.constant 0 : index
    %c0_1 = arith.constant 0 : index
    %3 = vector.load %arg8[%c0, %c0_1] : memref<256x128xf32, #tpu.memory_space<vmem>>, vector<256x128xf32>
    %c0_2 = arith.constant 0 : index
    %c0_3 = arith.constant 0 : index
    %4 = vector.load %arg3[%c0_2, %c0_3] : memref<256x256xf32, #tpu.memory_space<vmem>>, vector<256x256xf32>
    %c0_4 = arith.constant 0 : index
    %c0_5 = arith.constant 0 : index
    %5 = vector.load %arg4[%c0_4, %c0_5] : memref<256x128xf32, #tpu.memory_space<vmem>>, vector<256x128xf32>
    %cst = arith.constant dense<0.000000e+00> : vector<256x128xf32>
    %6 = tpu.matmul %4, %5, %cst {dimension_numbers = #tpu.dot_dimension_numbers<[1], [0], [0], [1], [0, 0, 1, 1], [], []>} : vector<256x256xf32>, vector<256x128xf32>, vector<256x128xf32> -> vector<256x128xf32>
    %7 = arith.addf %3, %6 : vector<256x128xf32>
    %c0_6 = arith.constant 0 : index
    %c0_7 = arith.constant 0 : index
    %8 = vector.load %arg8[%c0_6, %c0_7] : memref<256x128xf32, #tpu.memory_space<vmem>>, vector<256x128xf32>
    tpu.vector_store %arg8[%c0_6, %c0_7], %7 {strides = array<i32>} : memref<256x128xf32, #tpu.memory_space<vmem>>, vector<256x128xf32>,
    %c0_i32_8 = arith.constant 0 : i32
    %9 = arith.cmpi eq, %arg2, %c0_i32_8 : i32
    %10 = arith.extui %9 : i1 to i32
    %c0_i32_9 = arith.constant 0 : i32
    %11 = arith.cmpi ne, %10, %c0_i32_9 : i32
    scf.if %11 {
      %c0_10 = arith.constant 0 : index
      %c0_11 = arith.constant 0 : index
      %12 = vector.load %arg8[%c0_10, %c0_11] : memref<256x128xf32, #tpu.memory_space<vmem>>, vector<256x128xf32>
      %c0_12 = arith.constant 0 : index
      %c0_13 = arith.constant 0 : index
      %13 = vector.load %arg5[%c0_12, %c0_13] : memref<1x128xf32, #tpu.memory_space<vmem>>, vector<1x128xf32>
      %14 = vector.broadcast %13 : vector<1x128xf32> to vector<256x128xf32>
      %15 = arith.mulf %12, %14 : vector<256x128xf32>
      %c0_14 = arith.constant 0 : index
      %c0_15 = arith.constant 0 : index
      %16 = vector.load %arg6[%c0_14, %c0_15] : memref<1x128xf32, #tpu.memory_space<vmem>>, vector<1x128xf32>
      %17 = vector.broadcast %16 : vector<1x128xf32> to vector<256x128xf32>
      %18 = arith.addf %15, %17 : vector<256x128xf32>
      %cst_16 = arith.constant 0.000000e+00 : f32
      %19 = vector.broadcast %cst_16 : f32 to vector<256x128xf32>
      %20 = arith.maximumf %18, %19 : vector<256x128xf32>
      %c0_17 = arith.constant 0 : index
      %c0_18 = arith.constant 0 : index
      %21 = vector.load %arg7[%c0_17, %c0_18] : memref<256x128xf32, #tpu.memory_space<vmem>>, vector<256x128xf32>
      tpu.vector_store %arg7[%c0_17, %c0_18], %20 {strides = array<i32>} : memref<256x128xf32, #tpu.memory_space<vmem>>, vector<256x128xf32>,
    } else {
    }
    return
  }
  func.func @transform_0(%arg0: i32, %arg1: i32, %arg2: i32) -> (i32, i32) {
    %c0_i32 = arith.constant 0 : i32
    return %arg0, %arg2 : i32, i32
  }
  func.func @transform_1(%arg0: i32, %arg1: i32, %arg2: i32) -> (i32, i32) {
    %c0_i32 = arith.constant 0 : i32
    return %arg2, %arg1 : i32, i32
  }
  func.func @transform_2(%arg0: i32, %arg1: i32, %arg2: i32) -> (i32, i32) {
    %c0_i32 = arith.constant 0 : i32
    %c0_i32_0 = arith.constant 0 : i32
    return %c0_i32, %arg1 : i32, i32
  }
  func.func @transform_3(%arg0: i32, %arg1: i32, %arg2: i32) -> (i32, i32) {
    %c0_i32 = arith.constant 0 : i32
    %c0_i32_0 = arith.constant 0 : i32
    return %c0_i32, %arg1 : i32, i32
  }
  func.func @transform_4(%arg0: i32, %arg1: i32, %arg2: i32) -> (i32, i32) {
    %c0_i32 = arith.constant 0 : i32
    return %arg0, %arg1 : i32, i32
  }
}

</mosaic_0001>

<llo_original>
// kernel: _im2col_conv.1
$region0: #{_im2col_conv.1}
  #allocation0 [shape = 'u32[]', space=smem, size = 0x4, offset = 0x4, fixed_abs, tag = 'smem constant byte address 0x4 - core index']
  #allocation1 [shape = 'u32[144,128]{1,0:T(1,128)}', space=vmem, size = 0x12000, scoped, tag = 'internal scratch']
  #allocation2 [shape = 'f32[256,128]{1,0:T(8,128)}', space=vmem, size = 0x20000, scoped, tag = 'scratch operand']
  %s0 = inlined_call_operand.vmem [shape: f32[2048,256], index: 0, kind: input, shape index: {}]
  %s1 = inlined_call_operand.vmem [shape: f32[256,128], index: 1, kind: input, shape index: {}]
  %s2 = inlined_call_operand.vmem [shape: f32[1,128], index: 2, kind: input, shape index: {}]
  %s3 = inlined_call_operand.vmem [shape: f32[1,128], index: 3, kind: input, shape index: {}]
  %s4 = inlined_call_operand.hbm [shape: f32[2048,128], index: 4, kind: output, shape index: {}]
  %s5 = sld [smem:[#allocation0]]
  $region57: #{_im2col_conv.1} parent=0
    _
  %s7 = ssub.s32 1, %s5
  %s8 = scalar_select 0, %s7, %s5
  $region1: #{_im2col_conv.1} parent=0
    #allocation3 [shape = 'u8[262144]{0}', space=vmem, size = 0x40000, scoped, tag = 'output window, operand 0']
    #allocation4 [shape = 's32[2]{0}', space=sflag, size = 0x8, scoped, tag = 'scoped memory for _im2col_conv.1']
    %9 = vsyncpa [#allocation4], 0
    %s10 = scalar_lea.sflag [#allocation4], 1
    %11 = vsyncpa %s10, 0
    loop: start=0, step=1, limit=10
    $region2: #{_im2col_conv.1} parent=1 // loop_pre_header
      _
    $region3: #{_im2col_conv.1} parent=1 // loop_header
      %s13 = sphi 0, %s17
      %p14 = scmp.ge.s32.totalorder %s13, 10
      %s20 = sphi 0, %s39
      %s21 = sphi 0, %s35
      %s22 = sphi 0, %s31
      %s23 = sphi 0, %s20
      %s24 = sphi 0, %s21
      %s25 = sphi 0, %s22
      %s26 = sphi 0, %s23
      %s27 = sphi 0, %s24
      %s28 = sphi 0, %s25
      %s44 = sphi 0, %s46
      %s47 = sphi 0, %s44
      %s48 = sphi 0, %s47
      %s64 = sphi 0, %s48
      %s72 = sphi 0, %s74
      %s75 = sphi 0, %s72
      %s76 = sphi 0, %s75
      %s92 = sphi 0, %s76
      %s98 = sphi 0, %s100
      %s101 = sphi 0, %s98
      %s102 = sphi 0, %s101
      %s118 = sphi 0, %s102
      %s124 = sphi 0, %s126
      %s127 = sphi 0, %s124
      %s128 = sphi 0, %s127
      %s144 = sphi 0, %s128
      %s152 = sphi 0, %s154
      %s155 = sphi 0, %s152
      %s156 = sphi 0, %s155
      %s172 = sphi 0, %s156
    $region4: #{_im2col_conv.1} parent=1 // loop_header_branch
      %16 = sbr.rel (%p14) target = $region8
    $region5: #{_im2col_conv.1} parent=1 // loop_body
      %s18 = ssub.s32 %s13, 1
      %s19 = ssub.s32 %s13, 2
      %s29 = sadd.s32 1, %s22
      %p30 = scmp.ge.s32.totalorder %s29, 1
      %s31 = scalar_select %p30, 0, %s29
      %s32 = sadd.s32 1, %s21
      %s33 = scalar_select %p30, %s32, %s21
      %p34 = scmp.ge.s32.totalorder %s33, 1
      %s35 = scalar_select %p34, 0, %s33
      %s36 = sadd.s32 1, %s20
      %s37 = scalar_select %p34, %s36, %s20
      %p38 = scmp.ge.s32.totalorder %s37, 8
      %s39 = scalar_select %p38, 0, %s37
      %s40 = ssub.s32 %s20, %s39
      %s41 = ssub.s32 %s22, %s31
      %s42 = sor.u32 %s40, %s41
      %p43 = scmp.eq.s32.totalorder %s42, 0
      %s45 = sadd.s32 %s44, 1
      %s46 = scalar_select %p43, %s44, %s45
      %p49 = pneg %p43
      %p50 = scmp.eq.s32.totalorder %s13, 7
      %p51 = por %p49, %p50
      %p52 = scmp.ne.s32.totalorder %s44, %s47
      %p53 = scmp.eq.s32.totalorder %s13, 0
      %p54 = por %p52, %p53
      %p55 = scmp.ne.s32.totalorder %s44, %s47
      %p56 = scmp.eq.s32.totalorder %s18, 7
      %p57 = por %p55, %p56
      %p58 = scmp.ne.s32.totalorder %s47, %s48
      %p59 = scmp.eq.s32.totalorder %s18, 0
      %p60 = por %p58, %p59
      %p61 = scmp.ne.s32.totalorder %s47, %s48
      %p62 = scmp.eq.s32.totalorder %s19, 7
      %p63 = por %p61, %p62
      %p65 = scmp.ne.s32.totalorder %s48, %s64
      %p66 = scmp.eq.s32.totalorder %s19, 0
      %p67 = por %p65, %p66
      %s68 = ssub.s32 %s22, %s31
      %s69 = ssub.s32 %s21, %s35
      %s70 = sor.u32 %s68, %s69
      %p71 = scmp.eq.s32.totalorder %s70, 0
      %s73 = sadd.s32 %s72, 1
      %s74 = scalar_select %p71, %s72, %s73
      %p77 = pneg %p71
      %p78 = scmp.eq.s32.totalorder %s13, 7
      %p79 = por %p77, %p78
      %p80 = scmp.ne.s32.totalorder %s72, %s75
      %p81 = scmp.eq.s32.totalorder %s13, 0
      %p82 = por %p80, %p81
      %p83 = scmp.ne.s32.totalorder %s72, %s75
      %p84 = scmp.eq.s32.totalorder %s18, 7
      %p85 = por %p83, %p84
      %p86 = scmp.ne.s32.totalorder %s75, %s76
      %p87 = scmp.eq.s32.totalorder %s18, 0
      %p88 = por %p86, %p87
      %p89 = scmp.ne.s32.totalorder %s75, %s76
      %p90 = scmp.eq.s32.totalorder %s19, 7
      %p91 = por %p89, %p90
      %p93 = scmp.ne.s32.totalorder %s76, %s92
      %p94 = scmp.eq.s32.totalorder %s19, 0
      %p95 = por %p93, %p94
      %s96 = ssub.s32 %s21, %s35
      %p97 = scmp.eq.s32.totalorder %s96, 0
      %s99 = sadd.s32 %s98, 1
      %s100 = scalar_select %p97, %s98, %s99
      %p103 = pneg %p97
      %p104 = scmp.eq.s32.totalorder %s13, 7
      %p105 = por %p103, %p104
      %p106 = scmp.ne.s32.totalorder %s98, %s101
      %p107 = scmp.eq.s32.totalorder %s13, 0
      %p108 = por %p106, %p107
      %p109 = scmp.ne.s32.totalorder %s98, %s101
      %p110 = scmp.eq.s32.totalorder %s18, 7
      %p111 = por %p109, %p110
      %p112 = scmp.ne.s32.totalorder %s101, %s102
      %p113 = scmp.eq.s32.totalorder %s18, 0
      %p114 = por %p112, %p113
      %p115 = scmp.ne.s32.totalorder %s101, %s102
      %p116 = scmp.eq.s32.totalorder %s19, 7
      %p117 = por %p115, %p116
      %p119 = scmp.ne.s32.totalorder %s102, %s118
      %p120 = scmp.eq.s32.totalorder %s19, 0
      %p121 = por %p119, %p120
      %s122 = ssub.s32 %s21, %s35
      %p123 = scmp.eq.s32.totalorder %s122, 0
      %s125 = sadd.s32 %s124, 1
      %s126 = scalar_select %p123, %s124, %s125
      %p129 = pneg %p123
      %p130 = scmp.eq.s32.totalorder %s13, 7
      %p131 = por %p129, %p130
      %p132 = scmp.ne.s32.totalorder %s124, %s127
      %p133 = scmp.eq.s32.totalorder %s13, 0
      %p134 = por %p132, %p133
      %p135 = scmp.ne.s32.totalorder %s124, %s127
      %p136 = scmp.eq.s32.totalorder %s18, 7
      %p137 = por %p135, %p136
      %p138 = scmp.ne.s32.totalorder %s127, %s128
      %p139 = scmp.eq.s32.totalorder %s18, 0
      %p140 = por %p138, %p139
      %p141 = scmp.ne.s32.totalorder %s127, %s128
      %p142 = scmp.eq.s32.totalorder %s19, 7
      %p143 = por %p141, %p142
      %p145 = scmp.ne.s32.totalorder %s128, %s144
      %p146 = scmp.eq.s32.totalorder %s19, 0
      %p147 = por %p145, %p146
      %s148 = ssub.s32 %s20, %s39
      %s149 = ssub.s32 %s21, %s35
      %s150 = sor.u32 %s148, %s149
      %p151 = scmp.eq.s32.totalorder %s150, 0
      %s153 = sadd.s32 %s152, 1
      %s154 = scalar_select %p151, %s152, %s153
      %p157 = pneg %p151
      %p158 = scmp.eq.s32.totalorder %s13, 7
      %p159 = por %p157, %p158
      %p160 = scmp.ne.s32.totalorder %s152, %s155
      %p161 = scmp.eq.s32.totalorder %s13, 0
      %p162 = por %p160, %p161
      %p163 = scmp.ne.s32.totalorder %s152, %s155
      %p164 = scmp.eq.s32.totalorder %s18, 7
      %p165 = por %p163, %p164
      %p166 = scmp.ne.s32.totalorder %s155, %s156
      %p167 = scmp.eq.s32.totalorder %s18, 0
      %p168 = por %p166, %p167
      %p169 = scmp.ne.s32.totalorder %s155, %s156
      %p170 = scmp.eq.s32.totalorder %s19, 7
      %p171 = por %p169, %p170
      %p173 = scmp.ne.s32.totalorder %s156, %s172
      %p174 = scmp.eq.s32.totalorder %s19, 0
      %p175 = por %p173, %p174
      %p176 = scmp.le.s32.totalorder 1, %s13
      %p177 = scmp.lt.s32.totalorder %s13, 9
      %p178 = pnand %p176, %p177
      %p179 = pneg %p178
      // Predicated region
      $region9: #{_im2col_conv.1} parent=5 // pred_check
        _
      $region10: #{_im2col_conv.1} parent=5 // pred_check_branch
        %181 = sbr.rel (%p178) target = $region12
      $region11: #{_im2col_conv.1} parent=5 // pred_region
        %s182 = ssub.s32 %s13, 1
        // Predicated region
        $region13: #{_im2col_conv.1} parent=11 // pred_check
          %p183 = pneg %p88
        $region14: #{_im2col_conv.1} parent=11 // pred_check_branch
          %185 = sbr.rel (%p183) target = $region16
        $region15: #{_im2col_conv.1} parent=11 // pred_region
          %s186 = smul.u32 32, %s25
          %p187 = scmp.lt.s32.totalorder %s186, 31
          %s188 = scalar_select %p187, %s186, 31
          %p189 = scmp.lt.s32.totalorder %s24, 0
          %s190 = scalar_select %p189, %s24, 0
          %s191 = sadd.s32 %s190, %s188
          %s192 = smul.addr %s191, 8
          %s193 = scalar_lea.vmem %s1, %s192
          %s194 = smul.u32 32, %s25
        $region16: #{_im2col_conv.1} parent=11 // pred_fallthru
          _
        // Predicated region
        $region17: #{_im2col_conv.1} parent=11 // pred_check
          %p195 = pneg %p114
        $region18: #{_im2col_conv.1} parent=11 // pred_check_branch
          %197 = sbr.rel (%p195) target = $region20
        $region19: #{_im2col_conv.1} parent=11 // pred_region
          %p198 = scmp.lt.s32.totalorder %s24, 0
          %s199 = scalar_select %p198, %s24, 0
          %s200 = scalar_lea.vmem %s2, %s199
        $region20: #{_im2col_conv.1} parent=11 // pred_fallthru
          _
        // Predicated region
        $region21: #{_im2col_conv.1} parent=11 // pred_check
          %p201 = pneg %p140
        $region22: #{_im2col_conv.1} parent=11 // pred_check_branch
          %203 = sbr.rel (%p201) target = $region24
        $region23: #{_im2col_conv.1} parent=11 // pred_region
          %p204 = scmp.lt.s32.totalorder %s24, 0
          %s205 = scalar_select %p204, %s24, 0
          %s206 = scalar_lea.vmem %s3, %s205
        $region24: #{_im2col_conv.1} parent=11 // pred_fallthru
          _
      $region12: #{_im2col_conv.1} parent=5 // pred_fallthru
        _
      %p207 = scmp.lt.s32.totalorder %s13, 8
      // Predicated region
      $region25: #{_im2col_conv.1} parent=5 // pred_check
        %p208 = pneg %p207
      $region26: #{_im2col_conv.1} parent=5 // pred_check_branch
        %210 = sbr.rel (%p208) target = $region28
      $region27: #{_im2col_conv.1} parent=5 // pred_region
        // Predicated region
        $region29: #{_im2col_conv.1} parent=27 // pred_check
          %p211 = pneg %p54
        $region30: #{_im2col_conv.1} parent=27 // pred_check_branch
          %213 = sbr.rel (%p211) target = $region32
        $region31: #{_im2col_conv.1} parent=27 // pred_region
          %s214 = smul.u32 32, %s20
          %s215 = smul.u32 2, %s22
          %p216 = scmp.lt.s32.totalorder %s214, 255
          %s217 = scalar_select %p216, %s214, 255
          %p218 = scmp.lt.s32.totalorder %s215, 1
          %s219 = scalar_select %p218, %s215, 1
          %s220 = smul.addr %s217, 2
          %s221 = sadd.s32 %s219, %s220
          %s222 = smul.addr %s221, 8
          %s223 = scalar_lea.vmem %s0, %s222
          %s224 = smul.u32 32, %s20
          %s225 = smul.u32 2, %s22
        $region32: #{_im2col_conv.1} parent=27 // pred_fallthru
          _
      $region28: #{_im2col_conv.1} parent=5 // pred_fallthru
        _
      %p226 = scmp.le.s32.totalorder 1, %s13
      %p227 = scmp.lt.s32.totalorder %s13, 9
      %p228 = pnand %p226, %p227
      %p229 = pneg %p228
      // Predicated region
      $region33: #{_im2col_conv.1} parent=5 // pred_check
        _
      $region34: #{_im2col_conv.1} parent=5 // pred_check_branch
        %231 = sbr.rel (%p228) target = $region36
      $region35: #{_im2col_conv.1} parent=5 // pred_region
        %s232 = ssub.s32 %s13, 1
        %s233 = smul.u32 32, %s23
        %s234 = smul.u32 2, %s25
        %p235 = scmp.lt.s32.totalorder %s233, 255
        %s236 = scalar_select %p235, %s233, 255
        %p237 = scmp.lt.s32.totalorder %s234, 1
        %s238 = scalar_select %p237, %s234, 1
        %s239 = smul.addr %s236, 2
        %s240 = sadd.s32 %s238, %s239
        %s241 = smul.addr %s240, 8
        %s242 = scalar_lea.vmem %s0, %s241
        %p243 = pneg %p60
        %p244 = pneg %p57
        %s245 = smul.u32 32, %s25
        %p246 = scmp.lt.s32.totalorder %s245, 31
        %s247 = scalar_select %p246, %s245, 31
        %p248 = scmp.lt.s32.totalorder %s24, 0
        %s249 = scalar_select %p248, %s24, 0
        %s250 = sadd.s32 %s249, %s247
        %s251 = smul.addr %s250, 8
        %s252 = scalar_lea.vmem %s1, %s251
        %p253 = pneg %p88
        %p254 = pneg %p85
        %p255 = scmp.lt.s32.totalorder %s24, 0
        %s256 = scalar_select %p255, %s24, 0
        %s257 = scalar_lea.vmem %s2, %s256
        %p258 = pneg %p114
        %p259 = pneg %p111
        %p260 = scmp.lt.s32.totalorder %s24, 0
        %s261 = scalar_select %p260, %s24, 0
        %s262 = scalar_lea.vmem %s3, %s261
        %p263 = pneg %p140
        %p264 = pneg %p137
        %p265 = pneg %p168
        %p266 = pneg %p165
        %s267 = sand.u32 %s155, 1
        %s268 = scalar_lea.sflag [#allocation4], %s267
        %s269 = sand.u32 %s155, 1
        %s270 = smul.addr %s269, 256
        %s271 = scalar_lea.vmem [#allocation3], %s270
        %s272 = smul.u32 32, %s23
        %s273 = smul.u32 2, %s25
        %p274 = scmp.lt.s32.totalorder %s272, 255
        %s275 = scalar_select %p274, %s272, 255
        %p276 = scmp.lt.s32.totalorder %s273, 1
        %s277 = scalar_select %p276, %s273, 1
        %s278 = smul.addr %s275, 2
        %s279 = sadd.s32 %s277, %s278
        %s280 = smul.addr %s279, 8
        %s281 = scalar_lea.vmem %s0, %s280
        %s282 = smul.u32 32, %s23
        %s283 = smul.u32 2, %s25
        %s284 = smul.u32 32, %s25
        %p285 = scmp.lt.s32.totalorder %s284, 31
        %s286 = scalar_select %p285, %s284, 31
        %p287 = scmp.lt.s32.totalorder %s24, 0
        %s288 = scalar_select %p287, %s24, 0
        %s289 = sadd.s32 %s288, %s286
        %s290 = smul.addr %s289, 8
        %s291 = scalar_lea.vmem %s1, %s290
        %s292 = smul.u32 32, %s25
        %p293 = scmp.lt.s32.totalorder %s24, 0
        %s294 = scalar_select %p293, %s24, 0
        %s295 = scalar_lea.vmem %s2, %s294
        %p296 = scmp.lt.s32.totalorder %s24, 0
        %s297 = scalar_select %p296, %s24, 0
        %s298 = scalar_lea.vmem %s3, %s297
        %s299 = smul.u32 32, %s23
        %p300 = scmp.eq.s32.totalorder %s25, 0
        // Predicated region
        $region37: #{_im2col_conv.1} parent=35 // pred_check
          %p301 = pneg %p300
        $region38: #{_im2col_conv.1} parent=35 // pred_check_branch
          %303 = sbr.rel (%p301) target = $region40
        $region39: #{_im2col_conv.1} parent=35 // pred_region
          %304 = vst [vmem:[#allocation2] sm:$0xff] 0.0
          %305 = vst [vmem:[#allocation2 + $0x8] sm:$0xff] 0.0
          %306 = vst [vmem:[#allocation2 + $0x10] sm:$0xff] 0.0
          %307 = vst [vmem:[#allocation2 + $0x18] sm:$0xff] 0.0
          %308 = vst [vmem:[#allocation2 + $0x20] sm:$0xff] 0.0
          %309 = vst [vmem:[#allocation2 + $0x28] sm:$0xff] 0.0
          %310 = vst [vmem:[#allocation2 + $0x30] sm:$0xff] 0.0
          %311 = vst [vmem:[#allocation2 + $0x38] sm:$0xff] 0.0
          %312 = vst [vmem:[#allocation2 + $0x40] sm:$0xff] 0.0
          %313 = vst [vmem:[#allocation2 + $0x48] sm:$0xff] 0.0
          %314 = vst [vmem:[#allocation2 + $0x50] sm:$0xff] 0.0
          %315 = vst [vmem:[#allocation2 + $0x58] sm:$0xff] 0.0
          %316 = vst [vmem:[#allocation2 + $0x60] sm:$0xff] 0.0
          %317 = vst [vmem:[#allocation2 + $0x68] sm:$0xff] 0.0
          %318 = vst [vmem:[#allocation2 + $0x70] sm:$0xff] 0.0
          %319 = vst [vmem:[#allocation2 + $0x78] sm:$0xff] 0.0
          %320 = vst [vmem:[#allocation2 + $0x80] sm:$0xff] 0.0
          %321 = vst [vmem:[#allocation2 + $0x88] sm:$0xff] 0.0
          %322 = vst [vmem:[#allocation2 + $0x90] sm:$0xff] 0.0
          %323 = vst [vmem:[#allocation2 + $0x98] sm:$0xff] 0.0
          %324 = vst [vmem:[#allocation2 + $0xa0] sm:$0xff] 0.0
          %325 = vst [vmem:[#allocation2 + $0xa8] sm:$0xff] 0.0
          %326 = vst [vmem:[#allocation2 + $0xb0] sm:$0xff] 0.0
          %327 = vst [vmem:[#allocation2 + $0xb8] sm:$0xff] 0.0
          %328 = vst [vmem:[#allocation2 + $0xc0] sm:$0xff] 0.0
          %329 = vst [vmem:[#allocation2 + $0xc8] sm:$0xff] 0.0
          %330 = vst [vmem:[#allocation2 + $0xd0] sm:$0xff] 0.0
          %331 = vst [vmem:[#allocation2 + $0xd8] sm:$0xff] 0.0
          %332 = vst [vmem:[#allocation2 + $0xe0] sm:$0xff] 0.0
          %333 = vst [vmem:[#allocation2 + $0xe8] sm:$0xff] 0.0
          %334 = vst [vmem:[#allocation2 + $0xf0] sm:$0xff] 0.0
          %335 = vst [vmem:[#allocation2 + $0xf8] sm:$0xff] 0.0
        $region40: #{_im2col_conv.1} parent=35 // pred_fallthru
          _
        %v336 = vld [vmem:[#allocation2] sm:$0xff]
        %v337 = vld [vmem:[#allocation2 + $0x8] sm:$0xff]
        %v338 = vld [vmem:[#allocation2 + $0x10] sm:$0xff]
        %v339 = vld [vmem:[#allocation2 + $0x18] sm:$0xff]
        %v340 = vld [vmem:[#allocation2 + $0x20] sm:$0xff]
        %v341 = vld [vmem:[#allocation2 + $0x28] sm:$0xff]
        %v342 = vld [vmem:[#allocation2 + $0x30] sm:$0xff]
        %v343 = vld [vmem:[#allocation2 + $0x38] sm:$0xff]
        %v344 = vld [vmem:[#allocation2 + $0x40] sm:$0xff]
        %v345 = vld [vmem:[#allocation2 + $0x48] sm:$0xff]
        %v346 = vld [vmem:[#allocation2 + $0x50] sm:$0xff]
        %v347 = vld [vmem:[#allocation2 + $0x58] sm:$0xff]
        %v348 = vld [vmem:[#allocation2 + $0x60] sm:$0xff]
        %v349 = vld [vmem:[#allocation2 + $0x68] sm:$0xff]
        %v350 = vld [vmem:[#allocation2 + $0x70] sm:$0xff]
        %v351 = vld [vmem:[#allocation2 + $0x78] sm:$0xff]
        %v352 = vld [vmem:[#allocation2 + $0x80] sm:$0xff]
        %v353 = vld [vmem:[#allocation2 + $0x88] sm:$0xff]
        %v354 = vld [vmem:[#allocation2 + $0x90] sm:$0xff]
        %v355 = vld [vmem:[#allocation2 + $0x98] sm:$0xff]
        %v356 = vld [vmem:[#allocation2 + $0xa0] sm:$0xff]
        %v357 = vld [vmem:[#allocation2 + $0xa8] sm:$0xff]
        %v358 = vld [vmem:[#allocation2 + $0xb0] sm:$0xff]
        %v359 = vld [vmem:[#allocation2 + $0xb8] sm:$0xff]
        %v360 = vld [vmem:[#allocation2 + $0xc0] sm:$0xff]
        %v361 = vld [vmem:[#allocation2 + $0xc8] sm:$0xff]
        %v362 = vld [vmem:[#allocation2 + $0xd0] sm:$0xff]
        %v363 = vld [vmem:[#allocation2 + $0xd8] sm:$0xff]
        %v364 = vld [vmem:[#allocation2 + $0xe0] sm:$0xff]
        %v365 = vld [vmem:[#allocation2 + $0xe8] sm:$0xff]
        %v366 = vld [vmem:[#allocation2 + $0xf0] sm:$0xff]
        %v367 = vld [vmem:[#allocation2 + $0xf8] sm:$0xff]
        %v368 = vld [vmem:[%s281] sm:$0xff]
        %v369 = vld [vmem:[%s281 + $0x8] sm:$0xff]
        %v370 = vld [vmem:[%s281 + $0x10] sm:$0xff]
        %v371 = vld [vmem:[%s281 + $0x18] sm:$0xff]
        %v372 = vld [vmem:[%s281 + $0x20] sm:$0xff]
        %v373 = vld [vmem:[%s281 + $0x28] sm:$0xff]
        %v374 = vld [vmem:[%s281 + $0x30] sm:$0xff]
        %v375 = vld [vmem:[%s281 + $0x38] sm:$0xff]
        %v376 = vld [vmem:[%s281 + $0x40] sm:$0xff]
        %v377 = vld [vmem:[%s281 + $0x48] sm:$0xff]
        %v378 = vld [vmem:[%s281 + $0x50] sm:$0xff]
        %v379 = vld [vmem:[%s281 + $0x58] sm:$0xff]
        %v380 = vld [vmem:[%s281 + $0x60] sm:$0xff]
        %v381 = vld [vmem:[%s281 + $0x68] sm:$0xff]
        %v382 = vld [vmem:[%s281 + $0x70] sm:$0xff]
        %v383 = vld [vmem:[%s281 + $0x78] sm:$0xff]
        %v384 = vld [vmem:[%s281 + $0x80] sm:$0xff]
        %v385 = vld [vmem:[%s281 + $0x88] sm:$0xff]
        %v386 = vld [vmem:[%s281 + $0x90] sm:$0xff]
        %v387 = vld [vmem:[%s281 + $0x98] sm:$0xff]
        %v388 = vld [vmem:[%s281 + $0xa0] sm:$0xff]
        %v389 = vld [vmem:[%s281 + $0xa8] sm:$0xff]
        %v390 = vld [vmem:[%s281 + $0xb0] sm:$0xff]
        %v391 = vld [vmem:[%s281 + $0xb8] sm:$0xff]
        %v392 = vld [vmem:[%s281 + $0xc0] sm:$0xff]
        %v393 = vld [vmem:[%s281 + $0xc8] sm:$0xff]
        %v394 = vld [vmem:[%s281 + $0xd0] sm:$0xff]
        %v395 = vld [vmem:[%s281 + $0xd8] sm:$0xff]
        %v396 = vld [vmem:[%s281 + $0xe0] sm:$0xff]
        %v397 = vld [vmem:[%s281 + $0xe8] sm:$0xff]
        %v398 = vld [vmem:[%s281 + $0xf0] sm:$0xff]
        %v399 = vld [vmem:[%s281 + $0xf8] sm:$0xff]
        %v400 = vld [vmem:[%s281 + $0x100] sm:$0xff]
        %v401 = vld [vmem:[%s281 + $0x108] sm:$0xff]
        %v402 = vld [vmem:[%s281 + $0x110] sm:$0xff]
        %v403 = vld [vmem:[%s281 + $0x118] sm:$0xff]
        %v404 = vld [vmem:[%s281 + $0x120] sm:$0xff]
        %v405 = vld [vmem:[%s281 + $0x128] sm:$0xff]
        %v406 = vld [vmem:[%s281 + $0x130] sm:$0xff]
        %v407 = vld [vmem:[%s281 + $0x138] sm:$0xff]
        %v408 = vld [vmem:[%s281 + $0x140] sm:$0xff]
        %v409 = vld [vmem:[%s281 + $0x148] sm:$0xff]
        %v410 = vld [vmem:[%s281 + $0x150] sm:$0xff]
        %v411 = vld [vmem:[%s281 + $0x158] sm:$0xff]
        %v412 = vld [vmem:[%s281 + $0x160] sm:$0xff]
        %v413 = vld [vmem:[%s281 + $0x168] sm:$0xff]
        %v414 = vld [vmem:[%s281 + $0x170] sm:$0xff]
        %v415 = vld [vmem:[%s281 + $0x178] sm:$0xff]
        %v416 = vld [vmem:[%s281 + $0x180] sm:$0xff]
        %v417 = vld [vmem:[%s281 + $0x188] sm:$0xff]
        %v418 = vld [vmem:[%s281 + $0x190] sm:$0xff]
        %v419 = vld [vmem:[%s281 + $0x198] sm:$0xff]
        %v420 = vld [vmem:[%s281 + $0x1a0] sm:$0xff]
        %v421 = vld [vmem:[%s281 + $0x1a8] sm:$0xff]
        %v422 = vld [vmem:[%s281 + $0x1b0] sm:$0xff]
        %v423 = vld [vmem:[%s281 + $0x1b8] sm:$0xff]
        %v424 = vld [vmem:[%s281 + $0x1c0] sm:$0xff]
        %v425 = vld [vmem:[%s281 + $0x1c8] sm:$0xff]
        %v426 = vld [vmem:[%s281 + $0x1d0] sm:$0xff]
        %v427 = vld [vmem:[%s281 + $0x1d8] sm:$0xff]
        %v428 = vld [vmem:[%s281 + $0x1e0] sm:$0xff]
        %v429 = vld [vmem:[%s281 + $0x1e8] sm:$0xff]
        %v430 = vld [vmem:[%s281 + $0x1f0] sm:$0xff]
        %v431 = vld [vmem:[%s281 + $0x1f8] sm:$0xff]
        %v432 = vld [vmem:[%s291] sm:$0xff]
        %v433 = vld [vmem:[%s291 + $0x8] sm:$0xff]
        %v434 = vld [vmem:[%s291 + $0x10] sm:$0xff]
        %v435 = vld [vmem:[%s291 + $0x18] sm:$0xff]
        %v436 = vld [vmem:[%s291 + $0x20] sm:$0xff]
        %v437 = vld [vmem:[%s291 + $0x28] sm:$0xff]
        %v438 = vld [vmem:[%s291 + $0x30] sm:$0xff]
        %v439 = vld [vmem:[%s291 + $0x38] sm:$0xff]
        %v440 = vld [vmem:[%s291 + $0x40] sm:$0xff]
        %v441 = vld [vmem:[%s291 + $0x48] sm:$0xff]
        %v442 = vld [vmem:[%s291 + $0x50] sm:$0xff]
        %v443 = vld [vmem:[%s291 + $0x58] sm:$0xff]
        %v444 = vld [vmem:[%s291 + $0x60] sm:$0xff]
        %v445 = vld [vmem:[%s291 + $0x68] sm:$0xff]
        %v446 = vld [vmem:[%s291 + $0x70] sm:$0xff]
        %v447 = vld [vmem:[%s291 + $0x78] sm:$0xff]
        %v448 = vld [vmem:[%s291 + $0x80] sm:$0xff]
        %v449 = vld [vmem:[%s291 + $0x88] sm:$0xff]
        %v450 = vld [vmem:[%s291 + $0x90] sm:$0xff]
        %v451 = vld [vmem:[%s291 + $0x98] sm:$0xff]
        %v452 = vld [vmem:[%s291 + $0xa0] sm:$0xff]
        %v453 = vld [vmem:[%s291 + $0xa8] sm:$0xff]
        %v454 = vld [vmem:[%s291 + $0xb0] sm:$0xff]
        %v455 = vld [vmem:[%s291 + $0xb8] sm:$0xff]
        %v456 = vld [vmem:[%s291 + $0xc0] sm:$0xff]
        %v457 = vld [vmem:[%s291 + $0xc8] sm:$0xff]
        %v458 = vld [vmem:[%s291 + $0xd0] sm:$0xff]
        %v459 = vld [vmem:[%s291 + $0xd8] sm:$0xff]
        %v460 = vld [vmem:[%s291 + $0xe0] sm:$0xff]
        %v461 = vld [vmem:[%s291 + $0xe8] sm:$0xff]
        %v462 = vld [vmem:[%s291 + $0xf0] sm:$0xff]
        %v463 = vld [vmem:[%s291 + $0xf8] sm:$0xff]
        %464 = vmatprep.subr.mxu0 0.0
        %465 = vmatpush1.msra.mxu0 %v432
        %466 = vmatprep.subr.mxu0 0.0
        %467 = vmatpush1.msra.mxu0 %v433
        %468 = vmatprep.subr.mxu0 0.0
        %469 = vmatpush1.msra.mxu0 %v434
        %470 = vmatprep.subr.mxu0 0.0
        %471 = vmatpush1.msra.mxu0 %v435
        %472 = vmatprep.subr.mxu0 0.0
        %473 = vmatpush1.msra.mxu0 %v436
        %474 = vmatprep.subr.mxu0 0.0
        %475 = vmatpush1.msra.mxu0 %v437
        %476 = vmatprep.subr.mxu0 0.0
        %477 = vmatpush1.msra.mxu0 %v438
        %478 = vmatprep.subr.mxu0 0.0
        %479 = vmatpush1.msra.mxu0 %v439
        %480 = vmatprep.subr.mxu0 0.0
        %481 = vmatpush1.msra.mxu0 %v440
        %482 = vmatprep.subr.mxu0 0.0
        %483 = vmatpush1.msra.mxu0 %v441
        %484 = vmatprep.subr.mxu0 0.0
        %485 = vmatpush1.msra.mxu0 %v442
        %486 = vmatprep.subr.mxu0 0.0
        %487 = vmatpush1.msra.mxu0 %v443
        %488 = vmatprep.subr.mxu0 0.0
        %489 = vmatpush1.msra.mxu0 %v444
        %490 = vmatprep.subr.mxu0 0.0
        %491 = vmatpush1.msra.mxu0 %v445
        %492 = vmatprep.subr.mxu0 0.0
        %493 = vmatpush1.msra.mxu0 %v446
        %494 = vmatprep.subr.mxu0 0.0
        %495 = vmatpush1.msra.mxu0 %v447
        %496 = vmatprep.subr.mxu0 0.0
        %497 = vmatpush1.msra.mxu0 %v448
        %498 = vmatprep.subr.mxu0 0.0
        %499 = vmatpush1.msra.mxu0 %v449
        %500 = vmatprep.subr.mxu0 0.0
        %501 = vmatpush1.msra.mxu0 %v450
        %502 = vmatprep.subr.mxu0 0.0
        %503 = vmatpush1.msra.mxu0 %v451
        %504 = vmatprep.subr.mxu0 0.0
        %505 = vmatpush1.msra.mxu0 %v452
        %506 = vmatprep.subr.mxu0 0.0
        %507 = vmatpush1.msra.mxu0 %v453
        %508 = vmatprep.subr.mxu0 0.0
        %509 = vmatpush1.msra.mxu0 %v454
        %510 = vmatprep.subr.mxu0 0.0
        %511 = vmatpush1.msra.mxu0 %v455
        %512 = vmatprep.subr.mxu0 0.0
        %513 = vmatpush1.msra.mxu0 %v456
        %514 = vmatprep.subr.mxu0 0.0
        %515 = vmatpush1.msra.mxu0 %v457
        %516 = vmatprep.subr.mxu0 0.0
        %517 = vmatpush1.msra.mxu0 %v458
        %518 = vmatprep.subr.mxu0 0.0
        %519 = vmatpush1.msra.mxu0 %v459
        %520 = vmatprep.subr.mxu0 0.0
        %521 = vmatpush1.msra.mxu0 %v460
        %522 = vmatprep.subr.mxu0 0.0
        %523 = vmatpush1.msra.mxu0 %v461
        %524 = vmatprep.subr.mxu0 0.0
        %525 = vmatpush1.msra.mxu0 %v462
        %526 = vmatprep.subr.mxu0 0.0
        %527 = vmatpush1.msra.mxu0 %v463
        %528 = vmatprep.mubr.f32.mxu0 %v369
        %529 = vmatmul.mubr.f32.gmra.mrb[0].mxu0 %v368
        %v530 = vpop.f32.mrb[0].mxu0
        %v531 = vadd.f32 0.0, %v530
        %v532 = vpop.f32.mrb[0].mxu0
        %533 = vmatprep.mubr.f32.mxu0 %v371
        %534 = vmatmul.mubr.f32.gmra.mrb[0].mxu0 %v370
        %v535 = vpop.f32.mrb[0].mxu0
        %v536 = vadd.f32 0.0, %v535
        %v537 = vpop.f32.mrb[0].mxu0
        %538 = vmatprep.mubr.f32.mxu0 %v373
        %539 = vmatmul.mubr.f32.gmra.mrb[0].mxu0 %v372
        %v540 = vpop.f32.mrb[0].mxu0
        %v541 = vadd.f32 0.0, %v540
        %v542 = vpop.f32.mrb[0].mxu0
        %543 = vmatprep.mubr.f32.mxu0 %v375
        %544 = vmatmul.mubr.f32.gmra.mrb[0].mxu0 %v374
        %v545 = vpop.f32.mrb[0].mxu0
        %v546 = vadd.f32 0.0, %v545
        %v547 = vpop.f32.mrb[0].mxu0
        %548 = vmatprep.mubr.f32.mxu0 %v377
        %549 = vmatmul.mubr.f32.gmra.mrb[0].mxu0 %v376
        %v550 = vpop.f32.mrb[0].mxu0
        %v551 = vadd.f32 0.0, %v550
        %v552 = vpop.f32.mrb[0].mxu0
        %553 = vmatprep.mubr.f32.mxu0 %v379
        %554 = vmatmul.mubr.f32.gmra.mrb[0].mxu0 %v378
        %v555 = vpop.f32.mrb[0].mxu0
        %v556 = vadd.f32 0.0, %v555
        %v557 = vpop.f32.mrb[0].mxu0
        %558 = vmatprep.mubr.f32.mxu0 %v381
        %559 = vmatmul.mubr.f32.gmra.mrb[0].mxu0 %v380
        %v560 = vpop.f32.mrb[0].mxu0
        %v561 = vadd.f32 0.0, %v560
        %v562 = vpop.f32.mrb[0].mxu0
        %563 = vmatprep.mubr.f32.mxu0 %v383
        %564 = vmatmul.mubr.f32.gmra.mrb[0].mxu0 %v382
        %v565 = vpop.f32.mrb[0].mxu0
        %v566 = vadd.f32 0.0, %v565
        %v567 = vpop.f32.mrb[0].mxu0
        %568 = vmatprep.mubr.f32.mxu0 %v385
        %569 = vmatmul.mubr.f32.gmra.mrb[0].mxu0 %v384
        %v570 = vpop.f32.mrb[0].mxu0
        %v571 = vadd.f32 0.0, %v570
        %v572 = vpop.f32.mrb[0].mxu0
        %573 = vmatprep.mubr.f32.mxu0 %v387
        %574 = vmatmul.mubr.f32.gmra.mrb[0].mxu0 %v386
        %v575 = vpop.f32.mrb[0].mxu0
        %v576 = vadd.f32 0.0, %v575
        %v577 = vpop.f32.mrb[0].mxu0
        %578 = vmatprep.mubr.f32.mxu0 %v389
        %579 = vmatmul.mubr.f32.gmra.mrb[0].mxu0 %v388
        %v580 = vpop.f32.mrb[0].mxu0
        %v581 = vadd.f32 0.0, %v580
        %v582 = vpop.f32.mrb[0].mxu0
        %583 = vmatprep.mubr.f32.mxu0 %v391
        %584 = vmatmul.mubr.f32.gmra.mrb[0].mxu0 %v390
        %v585 = vpop.f32.mrb[0].mxu0
        %v586 = vadd.f32 0.0, %v585
        %v587 = vpop.f32.mrb[0].mxu0
        %588 = vmatprep.mubr.f32.mxu0 %v393
        %589 = vmatmul.mubr.f32.gmra.mrb[0].mxu0 %v392
        %v590 = vpop.f32.mrb[0].mxu0
        %v591 = vadd.f32 0.0, %v590
        %v592 = vpop.f32.mrb[0].mxu0
        %593 = vmatprep.mubr.f32.mxu0 %v395
        %594 = vmatmul.mubr.f32.gmra.mrb[0].mxu0 %v394
        %v595 = vpop.f32.mrb[0].mxu0
        %v596 = vadd.f32 0.0, %v595
        %v597 = vpop.f32.mrb[0].mxu0
        %598 = vmatprep.mubr.f32.mxu0 %v397
        %599 = vmatmul.mubr.f32.gmra.mrb[0].mxu0 %v396
        %v600 = vpop.f32.mrb[0].mxu0
        %v601 = vadd.f32 0.0, %v600
        %v602 = vpop.f32.mrb[0].mxu0
        %603 = vmatprep.mubr.f32.mxu0 %v399
        %604 = vmatmul.mubr.f32.gmra.mrb[0].mxu0 %v398
        %v605 = vpop.f32.mrb[0].mxu0
        %v606 = vadd.f32 0.0, %v605
        %v607 = vpop.f32.mrb[0].mxu0
        %608 = vmatprep.mubr.f32.mxu0 %v401
        %609 = vmatmul.mubr.f32.gmra.mrb[0].mxu0 %v400
        %v610 = vpop.f32.mrb[0].mxu0
        %v611 = vadd.f32 0.0, %v610
        %v612 = vpop.f32.mrb[0].mxu0
        %613 = vmatprep.mubr.f32.mxu0 %v403
        %614 = vmatmul.mubr.f32.gmra.mrb[0].mxu0 %v402
        %v615 = vpop.f32.mrb[0].mxu0
        %v616 = vadd.f32 0.0, %v615
        %v617 = vpop.f32.mrb[0].mxu0
        %618 = vmatprep.mubr.f32.mxu0 %v405
        %619 = vmatmul.mubr.f32.gmra.mrb[0].mxu0 %v404
        %v620 = vpop.f32.mrb[0].mxu0
        %v621 = vadd.f32 0.0, %v620
        %v622 = vpop.f32.mrb[0].mxu0
        %623 = vmatprep.mubr.f32.mxu0 %v407
        %624 = vmatmul.mubr.f32.gmra.mrb[0].mxu0 %v406
        %v625 = vpop.f32.mrb[0].mxu0
        %v626 = vadd.f32 0.0, %v625
        %v627 = vpop.f32.mrb[0].mxu0
        %628 = vmatprep.mubr.f32.mxu0 %v409
        %629 = vmatmul.mubr.f32.gmra.mrb[0].mxu0 %v408
        %v630 = vpop.f32.mrb[0].mxu0
        %v631 = vadd.f32 0.0, %v630
        %v632 = vpop.f32.mrb[0].mxu0
        %633 = vmatprep.mubr.f32.mxu0 %v411
        %634 = vmatmul.mubr.f32.gmra.mrb[0].mxu0 %v410
        %v635 = vpop.f32.mrb[0].mxu0
        %v636 = vadd.f32 0.0, %v635
        %v637 = vpop.f32.mrb[0].mxu0
        %638 = vmatprep.mubr.f32.mxu0 %v413
        %639 = vmatmul.mubr.f32.gmra.mrb[0].mxu0 %v412
        %v640 = vpop.f32.mrb[0].mxu0
        %v641 = vadd.f32 0.0, %v640
        %v642 = vpop.f32.mrb[0].mxu0
        %643 = vmatprep.mubr.f32.mxu0 %v415
        %644 = vmatmul.mubr.f32.gmra.mrb[0].mxu0 %v414
        %v645 = vpop.f32.mrb[0].mxu0
        %v646 = vadd.f32 0.0, %v645
        %v647 = vpop.f32.mrb[0].mxu0
        %648 = vmatprep.mubr.f32.mxu0 %v417
        %649 = vmatmul.mubr.f32.gmra.mrb[0].mxu0 %v416
        %v650 = vpop.f32.mrb[0].mxu0
        %v651 = vadd.f32 0.0, %v650
        %v652 = vpop.f32.mrb[0].mxu0
        %653 = vmatprep.mubr.f32.mxu0 %v419
        %654 = vmatmul.mubr.f32.gmra.mrb[0].mxu0 %v418
        %v655 = vpop.f32.mrb[0].mxu0
        %v656 = vadd.f32 0.0, %v655
        %v657 = vpop.f32.mrb[0].mxu0
        %658 = vmatprep.mubr.f32.mxu0 %v421
        %659 = vmatmul.mubr.f32.gmra.mrb[0].mxu0 %v420
        %v660 = vpop.f32.mrb[0].mxu0
        %v661 = vadd.f32 0.0, %v660
        %v662 = vpop.f32.mrb[0].mxu0
        %663 = vmatprep.mubr.f32.mxu0 %v423
        %664 = vmatmul.mubr.f32.gmra.mrb[0].mxu0 %v422
        %v665 = vpop.f32.mrb[0].mxu0
        %v666 = vadd.f32 0.0, %v665
        %v667 = vpop.f32.mrb[0].mxu0
        %668 = vmatprep.mubr.f32.mxu0 %v425
        %669 = vmatmul.mubr.f32.gmra.mrb[0].mxu0 %v424
        %v670 = vpop.f32.mrb[0].mxu0
        %v671 = vadd.f32 0.0, %v670
        %v672 = vpop.f32.mrb[0].mxu0
        %673 = vmatprep.mubr.f32.mxu0 %v427
        %674 = vmatmul.mubr.f32.gmra.mrb[0].mxu0 %v426
        %v675 = vpop.f32.mrb[0].mxu0
        %v676 = vadd.f32 0.0, %v675
        %v677 = vpop.f32.mrb[0].mxu0
        %678 = vmatprep.mubr.f32.mxu0 %v429
        %679 = vmatmul.mubr.f32.gmra.mrb[0].mxu0 %v428
        %v680 = vpop.f32.mrb[0].mxu0
        %v681 = vadd.f32 0.0, %v680
        %v682 = vpop.f32.mrb[0].mxu0
        %683 = vmatprep.mubr.f32.mxu0 %v431
        %684 = vmatmul.mubr.f32.gmra.mrb[0].mxu0 %v430
        %v685 = vpop.f32.mrb[0].mxu0
        %v686 = vadd.f32 0.0, %v685
        %v687 = vpop.f32.mrb[0].mxu0
        %688 = vdwg.mxu0
        %v689 = vadd.f32 %v336, %v531
        %v690 = vadd.f32 %v337, %v536
        %v691 = vadd.f32 %v338, %v541
        %v692 = vadd.f32 %v339, %v546
        %v693 = vadd.f32 %v340, %v551
        %v694 = vadd.f32 %v341, %v556
        %v695 = vadd.f32 %v342, %v561
        %v696 = vadd.f32 %v343, %v566
        %v697 = vadd.f32 %v344, %v571
        %v698 = vadd.f32 %v345, %v576
        %v699 = vadd.f32 %v346, %v581
        %v700 = vadd.f32 %v347, %v586
        %v701 = vadd.f32 %v348, %v591
        %v702 = vadd.f32 %v349, %v596
        %v703 = vadd.f32 %v350, %v601
        %v704 = vadd.f32 %v351, %v606
        %v705 = vadd.f32 %v352, %v611
        %v706 = vadd.f32 %v353, %v616
        %v707 = vadd.f32 %v354, %v621
        %v708 = vadd.f32 %v355, %v626
        %v709 = vadd.f32 %v356, %v631
        %v710 = vadd.f32 %v357, %v636
        %v711 = vadd.f32 %v358, %v641
        %v712 = vadd.f32 %v359, %v646
        %v713 = vadd.f32 %v360, %v651
        %v714 = vadd.f32 %v361, %v656
        %v715 = vadd.f32 %v362, %v661
        %v716 = vadd.f32 %v363, %v666
        %v717 = vadd.f32 %v364, %v671
        %v718 = vadd.f32 %v365, %v676
        %v719 = vadd.f32 %v366, %v681
        %v720 = vadd.f32 %v367, %v686
        %721 = vst [vmem:[#allocation2] sm:$0xff] %v689
        %722 = vst [vmem:[#allocation2 + $0x8] sm:$0xff] %v690
        %723 = vst [vmem:[#allocation2 + $0x10] sm:$0xff] %v691
        %724 = vst [vmem:[#allocation2 + $0x18] sm:$0xff] %v692
        %725 = vst [vmem:[#allocation2 + $0x20] sm:$0xff] %v693
        %726 = vst [vmem:[#allocation2 + $0x28] sm:$0xff] %v694
        %727 = vst [vmem:[#allocation2 + $0x30] sm:$0xff] %v695
        %728 = vst [vmem:[#allocation2 + $0x38] sm:$0xff] %v696
        %729 = vst [vmem:[#allocation2 + $0x40] sm:$0xff] %v697
        %730 = vst [vmem:[#allocation2 + $0x48] sm:$0xff] %v698
        %731 = vst [vmem:[#allocation2 + $0x50] sm:$0xff] %v699
        %732 = vst [vmem:[#allocation2 + $0x58] sm:$0xff] %v700
        %733 = vst [vmem:[#allocation2 + $0x60] sm:$0xff] %v701
        %734 = vst [vmem:[#allocation2 + $0x68] sm:$0xff] %v702
        %735 = vst [vmem:[#allocation2 + $0x70] sm:$0xff] %v703
        %736 = vst [vmem:[#allocation2 + $0x78] sm:$0xff] %v704
        %737 = vst [vmem:[#allocation2 + $0x80] sm:$0xff] %v705
        %738 = vst [vmem:[#allocation2 + $0x88] sm:$0xff] %v706
        %739 = vst [vmem:[#allocation2 + $0x90] sm:$0xff] %v707
        %740 = vst [vmem:[#allocation2 + $0x98] sm:$0xff] %v708
        %741 = vst [vmem:[#allocation2 + $0xa0] sm:$0xff] %v709
        %742 = vst [vmem:[#allocation2 + $0xa8] sm:$0xff] %v710
        %743 = vst [vmem:[#allocation2 + $0xb0] sm:$0xff] %v711
        %744 = vst [vmem:[#allocation2 + $0xb8] sm:$0xff] %v712
        %745 = vst [vmem:[#allocation2 + $0xc0] sm:$0xff] %v713
        %746 = vst [vmem:[#allocation2 + $0xc8] sm:$0xff] %v714
        %747 = vst [vmem:[#allocation2 + $0xd0] sm:$0xff] %v715
        %748 = vst [vmem:[#allocation2 + $0xd8] sm:$0xff] %v716
        %749 = vst [vmem:[#allocation2 + $0xe0] sm:$0xff] %v717
        %750 = vst [vmem:[#allocation2 + $0xe8] sm:$0xff] %v718
        %751 = vst [vmem:[#allocation2 + $0xf0] sm:$0xff] %v719
        %752 = vst [vmem:[#allocation2 + $0xf8] sm:$0xff] %v720
        // Predicated region
        $region41: #{_im2col_conv.1} parent=35 // pred_check
          %p753 = pneg %p300
        $region42: #{_im2col_conv.1} parent=35 // pred_check_branch
          %755 = sbr.rel (%p753) target = $region44
        $region43: #{_im2col_conv.1} parent=35 // pred_region
          %v756 = vld [vmem:[#allocation2] sm:$0xff]
          %v757 = vld [vmem:[#allocation2 + $0x8] sm:$0xff]
          %v758 = vld [vmem:[#allocation2 + $0x10] sm:$0xff]
          %v759 = vld [vmem:[#allocation2 + $0x18] sm:$0xff]
          %v760 = vld [vmem:[#allocation2 + $0x20] sm:$0xff]
          %v761 = vld [vmem:[#allocation2 + $0x28] sm:$0xff]
          %v762 = vld [vmem:[#allocation2 + $0x30] sm:$0xff]
          %v763 = vld [vmem:[#allocation2 + $0x38] sm:$0xff]
          %v764 = vld [vmem:[#allocation2 + $0x40] sm:$0xff]
          %v765 = vld [vmem:[#allocation2 + $0x48] sm:$0xff]
          %v766 = vld [vmem:[#allocation2 + $0x50] sm:$0xff]
          %v767 = vld [vmem:[#allocation2 + $0x58] sm:$0xff]
          %v768 = vld [vmem:[#allocation2 + $0x60] sm:$0xff]
          %v769 = vld [vmem:[#allocation2 + $0x68] sm:$0xff]
          %v770 = vld [vmem:[#allocation2 + $0x70] sm:$0xff]
          %v771 = vld [vmem:[#allocation2 + $0x78] sm:$0xff]
          %v772 = vld [vmem:[#allocation2 + $0x80] sm:$0xff]
          %v773 = vld [vmem:[#allocation2 + $0x88] sm:$0xff]
          %v774 = vld [vmem:[#allocation2 + $0x90] sm:$0xff]
          %v775 = vld [vmem:[#allocation2 + $0x98] sm:$0xff]
          %v776 = vld [vmem:[#allocation2 + $0xa0] sm:$0xff]
          %v777 = vld [vmem:[#allocation2 + $0xa8] sm:$0xff]
          %v778 = vld [vmem:[#allocation2 + $0xb0] sm:$0xff]
          %v779 = vld [vmem:[#allocation2 + $0xb8] sm:$0xff]
          %v780 = vld [vmem:[#allocation2 + $0xc0] sm:$0xff]
          %v781 = vld [vmem:[#allocation2 + $0xc8] sm:$0xff]
          %v782 = vld [vmem:[#allocation2 + $0xd0] sm:$0xff]
          %v783 = vld [vmem:[#allocation2 + $0xd8] sm:$0xff]
          %v784 = vld [vmem:[#allocation2 + $0xe0] sm:$0xff]
          %v785 = vld [vmem:[#allocation2 + $0xe8] sm:$0xff]
          %v786 = vld [vmem:[#allocation2 + $0xf0] sm:$0xff]
          %v787 = vld [vmem:[#allocation2 + $0xf8] sm:$0xff]
          %v788 = vld [vmem:[%s295] sm:$0x1]
          %v790 = vlaneseq
          %v791 = vshrl.u32 %v790, 7
          %v792 = vsub.s32 0, %v791
          %v793 = vrot.slane %v788, %v792
          %v795 = vmul.f32 %v756, %v793
          %v796 = vmul.f32 %v757, %v793
          %v797 = vmul.f32 %v758, %v793
          %v798 = vmul.f32 %v759, %v793
          %v799 = vmul.f32 %v760, %v793
          %v800 = vmul.f32 %v761, %v793
          %v801 = vmul.f32 %v762, %v793
          %v802 = vmul.f32 %v763, %v793
          %v803 = vmul.f32 %v764, %v793
          %v804 = vmul.f32 %v765, %v793
          %v805 = vmul.f32 %v766, %v793
          %v806 = vmul.f32 %v767, %v793
          %v807 = vmul.f32 %v768, %v793
          %v808 = vmul.f32 %v769, %v793
          %v809 = vmul.f32 %v770, %v793
          %v810 = vmul.f32 %v771, %v793
          %v811 = vmul.f32 %v772, %v793
          %v812 = vmul.f32 %v773, %v793
          %v813 = vmul.f32 %v774, %v793
          %v814 = vmul.f32 %v775, %v793
          %v815 = vmul.f32 %v776, %v793
          %v816 = vmul.f32 %v777, %v793
          %v817 = vmul.f32 %v778, %v793
          %v818 = vmul.f32 %v779, %v793
          %v819 = vmul.f32 %v780, %v793
          %v820 = vmul.f32 %v781, %v793
          %v821 = vmul.f32 %v782, %v793
          %v822 = vmul.f32 %v783, %v793
          %v823 = vmul.f32 %v784, %v793
          %v824 = vmul.f32 %v785, %v793
          %v825 = vmul.f32 %v786, %v793
          %v826 = vmul.f32 %v787, %v793
          %v827 = vld [vmem:[%s298] sm:$0x1]
          %v829 = vlaneseq
          %v830 = vshrl.u32 %v829, 7
          %v831 = vsub.s32 0, %v830
          %v832 = vrot.slane %v827, %v831
          %v834 = vadd.f32 %v795, %v832
          %v835 = vadd.f32 %v796, %v832
          %v836 = vadd.f32 %v797, %v832
          %v837 = vadd.f32 %v798, %v832
          %v838 = vadd.f32 %v799, %v832
          %v839 = vadd.f32 %v800, %v832
          %v840 = vadd.f32 %v801, %v832
          %v841 = vadd.f32 %v802, %v832
          %v842 = vadd.f32 %v803, %v832
          %v843 = vadd.f32 %v804, %v832
          %v844 = vadd.f32 %v805, %v832
          %v845 = vadd.f32 %v806, %v832
          %v846 = vadd.f32 %v807, %v832
          %v847 = vadd.f32 %v808, %v832
          %v848 = vadd.f32 %v809, %v832
          %v849 = vadd.f32 %v810, %v832
          %v850 = vadd.f32 %v811, %v832
          %v851 = vadd.f32 %v812, %v832
          %v852 = vadd.f32 %v813, %v832
          %v853 = vadd.f32 %v814, %v832
          %v854 = vadd.f32 %v815, %v832
          %v855 = vadd.f32 %v816, %v832
          %v856 = vadd.f32 %v817, %v832
          %v857 = vadd.f32 %v818, %v832
          %v858 = vadd.f32 %v819, %v832
          %v859 = vadd.f32 %v820, %v832
          %v860 = vadd.f32 %v821, %v832
          %v861 = vadd.f32 %v822, %v832
          %v862 = vadd.f32 %v823, %v832
          %v863 = vadd.f32 %v824, %v832
          %v864 = vadd.f32 %v825, %v832
          %v865 = vadd.f32 %v826, %v832
          %v866 = vmax.f32 %v834, 0.0
          %v867 = vmax.f32 %v835, 0.0
          %v868 = vmax.f32 %v836, 0.0
          %v869 = vmax.f32 %v837, 0.0
          %v870 = vmax.f32 %v838, 0.0
          %v871 = vmax.f32 %v839, 0.0
          %v872 = vmax.f32 %v840, 0.0
          %v873 = vmax.f32 %v841, 0.0
          %v874 = vmax.f32 %v842, 0.0
          %v875 = vmax.f32 %v843, 0.0
          %v876 = vmax.f32 %v844, 0.0
          %v877 = vmax.f32 %v845, 0.0
          %v878 = vmax.f32 %v846, 0.0
          %v879 = vmax.f32 %v847, 0.0
          %v880 = vmax.f32 %v848, 0.0
          %v881 = vmax.f32 %v849, 0.0
          %v882 = vmax.f32 %v850, 0.0
          %v883 = vmax.f32 %v851, 0.0
          %v884 = vmax.f32 %v852, 0.0
          %v885 = vmax.f32 %v853, 0.0
          %v886 = vmax.f32 %v854, 0.0
          %v887 = vmax.f32 %v855, 0.0
          %v888 = vmax.f32 %v856, 0.0
          %v889 = vmax.f32 %v857, 0.0
          %v890 = vmax.f32 %v858, 0.0
          %v891 = vmax.f32 %v859, 0.0
          %v892 = vmax.f32 %v860, 0.0
          %v893 = vmax.f32 %v861, 0.0
          %v894 = vmax.f32 %v862, 0.0
          %v895 = vmax.f32 %v863, 0.0
          %v896 = vmax.f32 %v864, 0.0
          %v897 = vmax.f32 %v865, 0.0
          %898 = vst [vmem:[%s271] sm:$0xff] %v866
          %899 = vst [vmem:[%s271 + $0x8] sm:$0xff] %v867
          %900 = vst [vmem:[%s271 + $0x10] sm:$0xff] %v868
          %901 = vst [vmem:[%s271 + $0x18] sm:$0xff] %v869
          %902 = vst [vmem:[%s271 + $0x20] sm:$0xff] %v870
          %903 = vst [vmem:[%s271 + $0x28] sm:$0xff] %v871
          %904 = vst [vmem:[%s271 + $0x30] sm:$0xff] %v872
          %905 = vst [vmem:[%s271 + $0x38] sm:$0xff] %v873
          %906 = vst [vmem:[%s271 + $0x40] sm:$0xff] %v874
          %907 = vst [vmem:[%s271 + $0x48] sm:$0xff] %v875
          %908 = vst [vmem:[%s271 + $0x50] sm:$0xff] %v876
          %909 = vst [vmem:[%s271 + $0x58] sm:$0xff] %v877
          %910 = vst [vmem:[%s271 + $0x60] sm:$0xff] %v878
          %911 = vst [vmem:[%s271 + $0x68] sm:$0xff] %v879
          %912 = vst [vmem:[%s271 + $0x70] sm:$0xff] %v880
          %913 = vst [vmem:[%s271 + $0x78] sm:$0xff] %v881
          %914 = vst [vmem:[%s271 + $0x80] sm:$0xff] %v882
          %915 = vst [vmem:[%s271 + $0x88] sm:$0xff] %v883
          %916 = vst [vmem:[%s271 + $0x90] sm:$0xff] %v884
          %917 = vst [vmem:[%s271 + $0x98] sm:$0xff] %v885
          %918 = vst [vmem:[%s271 + $0xa0] sm:$0xff] %v886
          %919 = vst [vmem:[%s271 + $0xa8] sm:$0xff] %v887
          %920 = vst [vmem:[%s271 + $0xb0] sm:$0xff] %v888
          %921 = vst [vmem:[%s271 + $0xb8] sm:$0xff] %v889
          %922 = vst [vmem:[%s271 + $0xc0] sm:$0xff] %v890
          %923 = vst [vmem:[%s271 + $0xc8] sm:$0xff] %v891
          %924 = vst [vmem:[%s271 + $0xd0] sm:$0xff] %v892
          %925 = vst [vmem:[%s271 + $0xd8] sm:$0xff] %v893
          %926 = vst [vmem:[%s271 + $0xe0] sm:$0xff] %v894
          %927 = vst [vmem:[%s271 + $0xe8] sm:$0xff] %v895
          %928 = vst [vmem:[%s271 + $0xf0] sm:$0xff] %v896
          %929 = vst [vmem:[%s271 + $0xf8] sm:$0xff] %v897
        $region44: #{_im2col_conv.1} parent=35 // pred_fallthru
          _
        %s930 = sand.u32 %s155, 1
        %s931 = scalar_lea.sflag [#allocation4], %s930
        %s932 = sand.u32 %s155, 1
        %s933 = smul.addr %s932, 256
        %s934 = scalar_lea.vmem [#allocation3], %s933
        // Predicated region
        $region45: #{_im2col_conv.1} parent=35 // pred_check
          %p935 = pneg %p165
        $region46: #{_im2col_conv.1} parent=35 // pred_check_branch
          %937 = sbr.rel (%p935) target = $region48
        $region47: #{_im2col_conv.1} parent=35 // pred_region
          %s938 = smul.u32 32, %s23
          %s940 = ssub.s32 4096, 4096
          %941 = vsyncadd %s931, %s940
          %s942 = sadd.s32 %s24, %s938
          %s943 = smul.addr %s942, 128
          %s944 = scalar_lea.hbm %s4, %s943
          %s945 = sshll.u32 %s934, 4
          %s946 = int_to_ptr.vmem [resolvable:$true] %s945
          %951 = dma.vmem_to_hbm [thread:$0]  %s946, 4096, %s944, %s931, 128, 128, 8
        $region48: #{_im2col_conv.1} parent=35 // pred_fallthru
          _
      $region36: #{_im2col_conv.1} parent=5 // pred_fallthru
        _
      %p952 = scmp.le.s32.totalorder 2, %s13
      // Predicated region
      $region49: #{_im2col_conv.1} parent=5 // pred_check
        %p953 = pneg %p952
      $region50: #{_im2col_conv.1} parent=5 // pred_check_branch
        %955 = sbr.rel (%p953) target = $region52
      $region51: #{_im2col_conv.1} parent=5 // pred_region
        %s956 = ssub.s32 %s13, 2
        // Predicated region
        $region53: #{_im2col_conv.1} parent=51 // pred_check
          %p957 = pneg %p171
        $region54: #{_im2col_conv.1} parent=51 // pred_check_branch
          %959 = sbr.rel (%p957) target = $region56
        $region55: #{_im2col_conv.1} parent=51 // pred_region
          %s960 = sand.u32 %s156, 1
          %s961 = scalar_lea.sflag [#allocation4], %s960
          %s962 = sand.u32 %s156, 1
          %s963 = smul.addr %s962, 256
          %s964 = scalar_lea.vmem [#allocation3], %s963
          %965 = dma.done %s961, 4096
        $region56: #{_im2col_conv.1} parent=51 // pred_fallthru
          _
      $region52: #{_im2col_conv.1} parent=5 // pred_fallthru
        _
    $region6: #{_im2col_conv.1} parent=1 // loop_footer
      %s17 = sadd.s32 1, %s13
    $region7: #{_im2col_conv.1} parent=1 // loop_footer_branch
      %12 = sbr.rel target = $region3
    $region8: #{_im2col_conv.1} parent=1 // loop_exit
      _
    %966 = vsyncpa [#allocation4], 1
    %s967 = scalar_lea.sflag [#allocation4], 1
    %968 = vsyncpa %s967, 1

</llo_original>
